<compile_context>
chip_gen: v7x
topology: tpu7x:2x2x1
jax: 0.10.0
libtpu: 0.0.40
codegen_flags: <defaults>
</compile_context>

<pallas_src>
import functools
import math

import jax
import jax.numpy as jnp
from jax.experimental import pallas as pl
from jax.experimental.pallas import tpu as pltpu

_TWO_PI = 2.0 * math.pi
_TINY_F32 = float(jnp.finfo(jnp.float32).tiny)
_LOG_TINY_F32 = math.log(_TINY_F32)
_Q_MAX = 1.0 - 1e-7
_LOG_Q_MAX = math.log1p(-1e-7)
# Factors folded into each log() of the truncated q-product.  5 gives an even
# 20/5 split (4 EUP logs).  Worst-case group product at the q = 1-1e-7 clamp
# is ~4.5e-29 > f32 min-normal; do not exceed 6 (7 underflows to 0 -> -inf).
_GROUP = 5


def _eta_kernel(x_ref, o_ref, *, scale, truncation, group):
    # Compute in f32 regardless of the input dtype (v5e has no bf16 VPU/EUP
    # and 1 - 1e-7 is not representable in bf16).
    x = x_ref[...].astype(jnp.float32)

    u = scale * x
    # Stable softplus, hand-written to avoid logaddexp's inf/nan/select traffic.
    y = jnp.maximum(u, 0.0) + jnp.log1p(jnp.exp(-jnp.abs(u)))   # 2 EUP ops
    z = -_TWO_PI * y                                            # z = log(q) pre-clamp
    # Single clamp in log space; q = exp(log_q) is then already inside
    # [tiny, 1 - 1e-7] and bit-consistent with log_q.
    log_q = jnp.clip(z, _LOG_TINY_F32, _LOG_Q_MAX)
    q = jnp.exp(log_q)                                          # 1 EUP op

    # q, q^2, ..., q^group  (VPU)
    q_pows = [q]
    for _ in range(1, group):
        q_pows.append(q_pows[-1] * q)

    # Running accumulator for log_eta = (1/24) log q + sum_n log(1 - q^n),
    # with `group` consecutive factors folded into one EUP log each.
    acc = (1.0 / 24.0) * log_q
    base = None                             # q^(start_of_group - 1); None == 1
    n_done = 0
    while n_done < truncation:
        g = min(group, truncation - n_done)
        prod = None
        p = None
        for j in range(g):
            p = q_pows[j] if base is None else base * q_pows[j]
            t = 1.0 - p
            prod = t if prod is None else prod * t
        acc = acc + jnp.log(prod)           # EUP: one log per group
        base = p                            # == q^(n_done + g); reused, no extra mul
        n_done += g

    o_ref[...] = (-acc).astype(o_ref.dtype)


def _round_up(a: int, b: int) -> int:
    return ((a + b - 1) // b) * b


def _sublane_multiple(dtype) -> int:
    itemsize = jnp.dtype(dtype).itemsize
    if itemsize >= 4:
        return 8
    if itemsize == 2:
        return 16
    return 32


def dedekind_eta_activation(x, *, scale: float = 1.0, truncation: int = 20,
                            tile_rows: int = 2048):
    """Pallas TPU implementation of DedekindEtaActivation.forward."""
    if truncation < 1:
        raise ValueError("truncation must be a positive integer")
    truncation = int(truncation)
    group = min(_GROUP, truncation)

    orig_shape = x.shape
    dtype = x.dtype
    lane = 128
    sub = _sublane_multiple(dtype)
    itemsize = jnp.dtype(dtype).itemsize

    flat = x.reshape(-1)
    n_elems = flat.shape[0]

    # Only lane (128) alignment is required; ragged last *blocks* (rows not a
    # multiple of the sublane tile) are masked by Pallas, so no padding there.
    rows = pl.cdiv(n_elems, lane)
    needs_pad = rows * lane != n_elems
    if needs_pad:
        # Rare for NN feature maps (numel % 128 != 0); pads < 128 elements but
        # the pad / trailing slice each cost an extra HBM pass.
        # TODO(synk): fold the tail into the kernel via a masked last block
        # (scalar-prefetched numel + pltpu.store mask) to avoid the extra pass.
        flat = jnp.pad(flat, (0, rows * lane - n_elems))
    x2d = flat.reshape(rows, lane)

    if rows <= sub:
        tile_r = rows                       # single block == full array (allowed)
    else:
        tile_r = min(int(tile_rows), rows)
        # Guarantee >=2 (prefer ~4) grid steps so the "parallel" axis shards
        # across both TensorCores on v7x; harmless on single-TC v5e/v6e.
        tile_r = min(tile_r, _round_up(pl.cdiv(rows, 4), sub))
        tile_r = max(sub, (tile_r // sub) * sub)
    grid = (pl.cdiv(rows, tile_r),)         # ragged last block handled by Pallas

    kernel = functools.partial(_eta_kernel, scale=float(scale),
                               truncation=truncation, group=group)

    # Advisory cost hint so XLA treats this as compute-heavy, not a cheap
    # elementwise op, when fused into a larger jit.
    cost = pl.CostEstimate(
        flops=80 * n_elems,
        transcendentals=(3 + pl.cdiv(truncation, group)) * n_elems,
        bytes_accessed=2 * n_elems * itemsize)

    out2d = pl.pallas_call(
        kernel,
        out_shape=jax.ShapeDtypeStruct((rows, lane), dtype),
        grid=grid,
        in_specs=[pl.BlockSpec((tile_r, lane), lambda i: (i, 0))],
        out_specs=pl.BlockSpec((tile_r, lane), lambda i: (i, 0)),
        compiler_params=pltpu.CompilerParams(
            dimension_semantics=("parallel",),
            vmem_limit_bytes=32 * 1024 * 1024),
        cost_estimate=cost,
    )(x2d)

    out_flat = out2d.reshape(-1)
    if needs_pad:
        out_flat = out_flat[:n_elems]
    return out_flat.reshape(orig_shape)


def _reference(x, *, scale: float = 1.0, truncation: int = 20):
    """Pure-JAX reference mirroring the PyTorch module exactly."""
    s = jnp.asarray(scale, dtype=x.dtype)
    y = jax.nn.softplus(s * x)
    q = jnp.exp(-2.0 * jnp.pi * y)
    tiny = jnp.finfo(x.dtype).tiny
    q = jnp.clip(q, tiny, 1.0 - 1e-7)
    n = jnp.arange(1, truncation + 1, dtype=x.dtype)
    q_pow_n = q[..., None] ** n
    log_terms = jnp.log1p(-q_pow_n)
    sum_log_terms = jnp.sum(log_terms, axis=-1)
    log_eta = (1.0 / 24.0) * jnp.log(q) + sum_log_terms
    return -log_eta


if __name__ == "__main__":
    key = jax.random.PRNGKey(0)
    # NCHW input consistent with a conv-net feature map.
    x = jax.random.normal(key, (2, 4, 16, 16), dtype=jnp.float32)

    out = dedekind_eta_activation(x, scale=1.0, truncation=20)
    out = jax.block_until_ready(out)

    ref = _reference(x, scale=1.0, truncation=20)
    assert out.shape == x.shape and out.dtype == x.dtype
    assert jnp.allclose(out, ref, rtol=1e-5, atol=1e-5), "mismatch vs reference"

    print("KERNEL_OK")
</pallas_src>

<mosaic_0001>
module attributes {stable_mosaic.version = 11 : i64} {
  func.func @_eta_kernel(%arg0: i32, %arg1: memref<8x128xf32, #tpu.memory_space<vmem>>, %arg2: memref<8x128xf32, #tpu.memory_space<vmem>>) attributes {dimension_semantics = [#tpu.dimension_semantics<parallel>], iteration_bounds = array<i64: 2>, scalar_prefetch = 0 : i64, scratch_operands = 0 : i64, tpu.core_type = #tpu.core_type<tc>, window_params = [{transform_indices = @transform_0, window_bounds = array<i64: 8, 128>}, {transform_indices = @transform_1, window_bounds = array<i64: 8, 128>}]} {
    %c0 = arith.constant 0 : index
    %c0_0 = arith.constant 0 : index
    %0 = vector.load %arg1[%c0, %c0_0] : memref<8x128xf32, #tpu.memory_space<vmem>>, vector<8x128xf32>
    %cst = arith.constant 1.000000e+00 : f32
    %1 = vector.broadcast %cst : f32 to vector<8x128xf32>
    %2 = arith.mulf %1, %0 : vector<8x128xf32>
    %cst_1 = arith.constant 0.000000e+00 : f32
    %3 = vector.broadcast %cst_1 : f32 to vector<8x128xf32>
    %4 = arith.maximumf %2, %3 : vector<8x128xf32>
    %5 = math.absf %2 : vector<8x128xf32>
    %cst_2 = arith.constant 0.000000e+00 : f32
    %6 = vector.broadcast %cst_2 : f32 to vector<8x128xf32>
    %7 = arith.subf %6, %5 : vector<8x128xf32>
    %8 = math.exp %7 : vector<8x128xf32>
    %9 = math.log1p %8 : vector<8x128xf32>
    %10 = arith.addf %4, %9 : vector<8x128xf32>
    %cst_3 = arith.constant -6.28318548 : f32
    %11 = vector.broadcast %cst_3 : f32 to vector<8x128xf32>
    %12 = arith.mulf %11, %10 : vector<8x128xf32>
    %cst_4 = arith.constant -87.3365478 : f32
    %cst_5 = arith.constant -1.00000008E-7 : f32
    %13 = vector.broadcast %cst_4 : f32 to vector<8x128xf32>
    %14 = arith.maximumf %13, %12 : vector<8x128xf32>
    %15 = vector.broadcast %cst_5 : f32 to vector<8x128xf32>
    %16 = arith.minimumf %15, %14 : vector<8x128xf32>
    %17 = math.exp %16 : vector<8x128xf32>
    %18 = arith.mulf %17, %17 : vector<8x128xf32>
    %19 = arith.mulf %18, %17 : vector<8x128xf32>
    %20 = arith.mulf %19, %17 : vector<8x128xf32>
    %21 = arith.mulf %20, %17 : vector<8x128xf32>
    %cst_6 = arith.constant 0.0416666679 : f32
    %22 = vector.broadcast %cst_6 : f32 to vector<8x128xf32>
    %23 = arith.mulf %22, %16 : vector<8x128xf32>
    %cst_7 = arith.constant 1.000000e+00 : f32
    %24 = vector.broadcast %cst_7 : f32 to vector<8x128xf32>
    %25 = arith.subf %24, %17 : vector<8x128xf32>
    %cst_8 = arith.constant 1.000000e+00 : f32
    %26 = vector.broadcast %cst_8 : f32 to vector<8x128xf32>
    %27 = arith.subf %26, %18 : vector<8x128xf32>
    %28 = arith.mulf %25, %27 : vector<8x128xf32>
    %cst_9 = arith.constant 1.000000e+00 : f32
    %29 = vector.broadcast %cst_9 : f32 to vector<8x128xf32>
    %30 = arith.subf %29, %19 : vector<8x128xf32>
    %31 = arith.mulf %28, %30 : vector<8x128xf32>
    %cst_10 = arith.constant 1.000000e+00 : f32
    %32 = vector.broadcast %cst_10 : f32 to vector<8x128xf32>
    %33 = arith.subf %32, %20 : vector<8x128xf32>
    %34 = arith.mulf %31, %33 : vector<8x128xf32>
    %cst_11 = arith.constant 1.000000e+00 : f32
    %35 = vector.broadcast %cst_11 : f32 to vector<8x128xf32>
    %36 = arith.subf %35, %21 : vector<8x128xf32>
    %37 = arith.mulf %34, %36 : vector<8x128xf32>
    %38 = math.log %37 : vector<8x128xf32>
    %39 = arith.addf %23, %38 : vector<8x128xf32>
    %40 = arith.mulf %21, %17 : vector<8x128xf32>
    %cst_12 = arith.constant 1.000000e+00 : f32
    %41 = vector.broadcast %cst_12 : f32 to vector<8x128xf32>
    %42 = arith.subf %41, %40 : vector<8x128xf32>
    %43 = arith.mulf %21, %18 : vector<8x128xf32>
    %cst_13 = arith.constant 1.000000e+00 : f32
    %44 = vector.broadcast %cst_13 : f32 to vector<8x128xf32>
    %45 = arith.subf %44, %43 : vector<8x128xf32>
    %46 = arith.mulf %42, %45 : vector<8x128xf32>
    %47 = arith.mulf %21, %19 : vector<8x128xf32>
    %cst_14 = arith.constant 1.000000e+00 : f32
    %48 = vector.broadcast %cst_14 : f32 to vector<8x128xf32>
    %49 = arith.subf %48, %47 : vector<8x128xf32>
    %50 = arith.mulf %46, %49 : vector<8x128xf32>
    %51 = arith.mulf %21, %20 : vector<8x128xf32>
    %cst_15 = arith.constant 1.000000e+00 : f32
    %52 = vector.broadcast %cst_15 : f32 to vector<8x128xf32>
    %53 = arith.subf %52, %51 : vector<8x128xf32>
    %54 = arith.mulf %50, %53 : vector<8x128xf32>
    %55 = arith.mulf %21, %21 : vector<8x128xf32>
    %cst_16 = arith.constant 1.000000e+00 : f32
    %56 = vector.broadcast %cst_16 : f32 to vector<8x128xf32>
    %57 = arith.subf %56, %55 : vector<8x128xf32>
    %58 = arith.mulf %54, %57 : vector<8x128xf32>
    %59 = math.log %58 : vector<8x128xf32>
    %60 = arith.addf %39, %59 : vector<8x128xf32>
    %61 = arith.mulf %55, %17 : vector<8x128xf32>
    %cst_17 = arith.constant 1.000000e+00 : f32
    %62 = vector.broadcast %cst_17 : f32 to vector<8x128xf32>
    %63 = arith.subf %62, %61 : vector<8x128xf32>
    %64 = arith.mulf %55, %18 : vector<8x128xf32>
    %cst_18 = arith.constant 1.000000e+00 : f32
    %65 = vector.broadcast %cst_18 : f32 to vector<8x128xf32>
    %66 = arith.subf %65, %64 : vector<8x128xf32>
    %67 = arith.mulf %63, %66 : vector<8x128xf32>
    %68 = arith.mulf %55, %19 : vector<8x128xf32>
    %cst_19 = arith.constant 1.000000e+00 : f32
    %69 = vector.broadcast %cst_19 : f32 to vector<8x128xf32>
    %70 = arith.subf %69, %68 : vector<8x128xf32>
    %71 = arith.mulf %67, %70 : vector<8x128xf32>
    %72 = arith.mulf %55, %20 : vector<8x128xf32>
    %cst_20 = arith.constant 1.000000e+00 : f32
    %73 = vector.broadcast %cst_20 : f32 to vector<8x128xf32>
    %74 = arith.subf %73, %72 : vector<8x128xf32>
    %75 = arith.mulf %71, %74 : vector<8x128xf32>
    %76 = arith.mulf %55, %21 : vector<8x128xf32>
    %cst_21 = arith.constant 1.000000e+00 : f32
    %77 = vector.broadcast %cst_21 : f32 to vector<8x128xf32>
    %78 = arith.subf %77, %76 : vector<8x128xf32>
    %79 = arith.mulf %75, %78 : vector<8x128xf32>
    %80 = math.log %79 : vector<8x128xf32>
    %81 = arith.addf %60, %80 : vector<8x128xf32>
    %82 = arith.mulf %76, %17 : vector<8x128xf32>
    %cst_22 = arith.constant 1.000000e+00 : f32
    %83 = vector.broadcast %cst_22 : f32 to vector<8x128xf32>
    %84 = arith.subf %83, %82 : vector<8x128xf32>
    %85 = arith.mulf %76, %18 : vector<8x128xf32>
    %cst_23 = arith.constant 1.000000e+00 : f32
    %86 = vector.broadcast %cst_23 : f32 to vector<8x128xf32>
    %87 = arith.subf %86, %85 : vector<8x128xf32>
    %88 = arith.mulf %84, %87 : vector<8x128xf32>
    %89 = arith.mulf %76, %19 : vector<8x128xf32>
    %cst_24 = arith.constant 1.000000e+00 : f32
    %90 = vector.broadcast %cst_24 : f32 to vector<8x128xf32>
    %91 = arith.subf %90, %89 : vector<8x128xf32>
    %92 = arith.mulf %88, %91 : vector<8x128xf32>
    %93 = arith.mulf %76, %20 : vector<8x128xf32>
    %cst_25 = arith.constant 1.000000e+00 : f32
    %94 = vector.broadcast %cst_25 : f32 to vector<8x128xf32>
    %95 = arith.subf %94, %93 : vector<8x128xf32>
    %96 = arith.mulf %92, %95 : vector<8x128xf32>
    %97 = arith.mulf %76, %21 : vector<8x128xf32>
    %cst_26 = arith.constant 1.000000e+00 : f32
    %98 = vector.broadcast %cst_26 : f32 to vector<8x128xf32>
    %99 = arith.subf %98, %97 : vector<8x128xf32>
    %100 = arith.mulf %96, %99 : vector<8x128xf32>
    %101 = math.log %100 : vector<8x128xf32>
    %102 = arith.addf %81, %101 : vector<8x128xf32>
    %cst_27 = arith.constant 0.000000e+00 : f32
    %103 = vector.broadcast %cst_27 : f32 to vector<8x128xf32>
    %104 = arith.subf %103, %102 : vector<8x128xf32>
    %c0_28 = arith.constant 0 : index
    %c0_29 = arith.constant 0 : index
    %105 = vector.load %arg2[%c0_28, %c0_29] : memref<8x128xf32, #tpu.memory_space<vmem>>, vector<8x128xf32>
    tpu.vector_store %arg2[%c0_28, %c0_29], %104 {strides = array<i32>} : memref<8x128xf32, #tpu.memory_space<vmem>>, vector<8x128xf32>,
    return
  }
  func.func @transform_0(%arg0: i32) -> (i32, i32) {
    %c0_i32 = arith.constant 0 : i32
    %c0_i32_0 = arith.constant 0 : i32
    return %arg0, %c0_i32 : i32, i32
  }
  func.func @transform_1(%arg0: i32) -> (i32, i32) {
    %c0_i32 = arith.constant 0 : i32
    %c0_i32_0 = arith.constant 0 : i32
    return %arg0, %c0_i32 : i32, i32
  }
}

</mosaic_0001>

<llo_original>
// kernel: tpu_custom_call.1
$region0: #{tpu_custom_call.1}
  #allocation0 [shape = 'u32[]', space=smem, size = 0x4, offset = 0x4, fixed_abs, tag = 'smem constant byte address 0x4 - core index']
  #allocation1 [shape = 'u32[144,128]{1,0:T(1,128)}', space=vmem, size = 0x12000, scoped, tag = 'internal scratch']
  %s0 = inlined_call_operand.hbm [shape: f32[16,128], index: 0, kind: input, shape index: {}]
  %s1 = inlined_call_operand.hbm [shape: f32[16,128], index: 1, kind: output, shape index: {}]
  %s2 = sld [smem:[#allocation0]]
  $region41: #{tpu_custom_call.1} parent=0
    _
  %s4 = ssub.s32 1, %s2
  %s5 = scalar_select 0, %s4, %s2
  $region1: #{tpu_custom_call.1} parent=0
    #allocation2 [shape = 'u8[8192]{0}', space=vmem, size = 0x2000, scoped, tag = 'input window, operand 0']
    #allocation3 [shape = 's32[2]{0}', space=sflag, size = 0x8, scoped, tag = 'scoped memory for tpu_custom_call.1']
    #allocation4 [shape = 's32[2]{0}', space=sflag, size = 0x8, scoped, tag = 'scoped memory for tpu_custom_call.1']
    #allocation5 [shape = 'u8[8192]{0}', space=vmem, size = 0x2000, scoped, tag = 'output window, operand 0']
    %6 = vsyncpa [#allocation3], 0
    %s7 = scalar_lea.sflag [#allocation3], 1
    %8 = vsyncpa %s7, 0
    %9 = vsyncpa [#allocation4], 0
    %s10 = scalar_lea.sflag [#allocation4], 1
    %11 = vsyncpa %s10, 0
    loop: start=0, step=1, limit=4
    $region2: #{tpu_custom_call.1} parent=1 // loop_pre_header
      _
    $region3: #{tpu_custom_call.1} parent=1 // loop_header
      %s13 = sphi 0, %s17
      %p14 = scmp.ge.s32.totalorder %s13, 4
      %s23 = sphi 0, %s25
      %s26 = sphi 0, %s23
      %s27 = sphi 0, %s26
      %s43 = sphi 0, %s27
      %s49 = sphi 0, %s51
      %s52 = sphi 0, %s49
      %s53 = sphi 0, %s52
      %s69 = sphi 0, %s53
    $region4: #{tpu_custom_call.1} parent=1 // loop_header_branch
      %16 = sbr.rel (%p14) target = $region8
    $region5: #{tpu_custom_call.1} parent=1 // loop_body
      %s18 = ssub.s32 %s13, 1
      %s19 = ssub.s32 %s13, 2
      %s20 = sadd.s32 %s13, 1
      %s21 = ssub.s32 %s13, %s20
      %p22 = scmp.eq.s32.totalorder %s21, 0
      %s24 = sadd.s32 %s23, 1
      %s25 = scalar_select %p22, %s23, %s24
      %p28 = pneg %p22
      %p29 = scmp.eq.s32.totalorder %s13, 1
      %p30 = por %p28, %p29
      %p31 = scmp.ne.s32.totalorder %s23, %s26
      %p32 = scmp.eq.s32.totalorder %s13, 0
      %p33 = por %p31, %p32
      %p34 = scmp.ne.s32.totalorder %s23, %s26
      %p35 = scmp.eq.s32.totalorder %s18, 1
      %p36 = por %p34, %p35
      %p37 = scmp.ne.s32.totalorder %s26, %s27
      %p38 = scmp.eq.s32.totalorder %s18, 0
      %p39 = por %p37, %p38
      %p40 = scmp.ne.s32.totalorder %s26, %s27
      %p41 = scmp.eq.s32.totalorder %s19, 1
      %p42 = por %p40, %p41
      %p44 = scmp.ne.s32.totalorder %s27, %s43
      %p45 = scmp.eq.s32.totalorder %s19, 0
      %p46 = por %p44, %p45
      %s47 = ssub.s32 %s13, %s20
      %p48 = scmp.eq.s32.totalorder %s47, 0
      %s50 = sadd.s32 %s49, 1
      %s51 = scalar_select %p48, %s49, %s50
      %p54 = pneg %p48
      %p55 = scmp.eq.s32.totalorder %s13, 1
      %p56 = por %p54, %p55
      %p57 = scmp.ne.s32.totalorder %s49, %s52
      %p58 = scmp.eq.s32.totalorder %s13, 0
      %p59 = por %p57, %p58
      %p60 = scmp.ne.s32.totalorder %s49, %s52
      %p61 = scmp.eq.s32.totalorder %s18, 1
      %p62 = por %p60, %p61
      %p63 = scmp.ne.s32.totalorder %s52, %s53
      %p64 = scmp.eq.s32.totalorder %s18, 0
      %p65 = por %p63, %p64
      %p66 = scmp.ne.s32.totalorder %s52, %s53
      %p67 = scmp.eq.s32.totalorder %s19, 1
      %p68 = por %p66, %p67
      %p70 = scmp.ne.s32.totalorder %s53, %s69
      %p71 = scmp.eq.s32.totalorder %s19, 0
      %p72 = por %p70, %p71
      %p73 = scmp.le.s32.totalorder 1, %s13
      %p74 = scmp.lt.s32.totalorder %s13, 3
      %p75 = pnand %p73, %p74
      %p76 = pneg %p75
      // Predicated region
      $region9: #{tpu_custom_call.1} parent=5 // pred_check
        _
      $region10: #{tpu_custom_call.1} parent=5 // pred_check_branch
        %78 = sbr.rel (%p75) target = $region12
      $region11: #{tpu_custom_call.1} parent=5 // pred_region
        %s79 = ssub.s32 %s13, 1
      $region12: #{tpu_custom_call.1} parent=5 // pred_fallthru
        _
      %p80 = scmp.lt.s32.totalorder %s13, 2
      // Predicated region
      $region13: #{tpu_custom_call.1} parent=5 // pred_check
        %p81 = pneg %p80
      $region14: #{tpu_custom_call.1} parent=5 // pred_check_branch
        %83 = sbr.rel (%p81) target = $region16
      $region15: #{tpu_custom_call.1} parent=5 // pred_region
        // Predicated region
        $region17: #{tpu_custom_call.1} parent=15 // pred_check
          %p84 = pneg %p33
        $region18: #{tpu_custom_call.1} parent=15 // pred_check_branch
          %86 = sbr.rel (%p84) target = $region20
        $region19: #{tpu_custom_call.1} parent=15 // pred_region
          %s87 = sand.u32 %s23, 1
          %s88 = scalar_lea.sflag [#allocation3], %s87
          %s89 = sand.u32 %s23, 1
          %s90 = smul.addr %s89, 8
          %s91 = scalar_lea.vmem [#allocation2], %s90
          %s93 = ssub.s32 128, 128
          %94 = vsyncadd %s88, %s93
          %s95 = smul.addr %s13, 128
          %s96 = scalar_lea.hbm %s0, %s95
          %s98 = sshll.u32 %s91, 4
          %s99 = int_to_ptr.vmem [resolvable:$true] %s98
          %101 = dma.hbm_to_vmem [thread:$0]  %s96, 128, %s99, %s88
        $region20: #{tpu_custom_call.1} parent=15 // pred_fallthru
          _
      $region16: #{tpu_custom_call.1} parent=5 // pred_fallthru
        _
      %p102 = scmp.le.s32.totalorder 1, %s13
      %p103 = scmp.lt.s32.totalorder %s13, 3
      %p104 = pnand %p102, %p103
      %p105 = pneg %p104
      // Predicated region
      $region21: #{tpu_custom_call.1} parent=5 // pred_check
        _
      $region22: #{tpu_custom_call.1} parent=5 // pred_check_branch
        %107 = sbr.rel (%p104) target = $region24
      $region23: #{tpu_custom_call.1} parent=5 // pred_region
        %s108 = ssub.s32 %s13, 1
        %s109 = sand.u32 %s26, 1
        %s110 = scalar_lea.sflag [#allocation3], %s109
        %s111 = sand.u32 %s26, 1
        %s112 = smul.addr %s111, 8
        %s113 = scalar_lea.vmem [#allocation2], %s112
        // Predicated region
        $region25: #{tpu_custom_call.1} parent=23 // pred_check
          %p114 = pneg %p39
        $region26: #{tpu_custom_call.1} parent=23 // pred_check_branch
          %116 = sbr.rel (%p114) target = $region28
        $region27: #{tpu_custom_call.1} parent=23 // pred_region
          %117 = dma.done %s110, 128
        $region28: #{tpu_custom_call.1} parent=23 // pred_fallthru
          _
        %s118 = sand.u32 %s26, 1
        %s119 = scalar_lea.sflag [#allocation3], %s118
        %s120 = sand.u32 %s26, 1
        %s121 = smul.addr %s120, 8
        %s122 = scalar_lea.vmem [#allocation2], %s121
        %p123 = pneg %p39
        %p124 = pneg %p36
        %p125 = pneg %p65
        %p126 = pneg %p62
        %s127 = sand.u32 %s52, 1
        %s128 = scalar_lea.sflag [#allocation4], %s127
        %s129 = sand.u32 %s52, 1
        %s130 = smul.addr %s129, 8
        %s131 = scalar_lea.vmem [#allocation5], %s130
        %v132 = vld [vmem:[%s113] sm:$0xff]
        %v133 = vmax.f32 %v132, 0.0
        %v134 = vand.u32 2147483647, %v132
        %v135 = vsub.f32 0.0, %v134
        %v136 = vmul.f32 %v135, 1.442695
        %v137 = vpow.pop %v136
        %v138 = vadd.f32 %v137, 1.0
        %v139 = vlog2.pop %v138
        %v140 = vmul.f32 %v139, 0.6931472
        %v141 = vmul.f32 -0.5, %v137
        %v142 = vadd.f32 %v141, 1.0
        %v143 = vmul.f32 %v142, %v137
        %v144 = vand.u32 2147483647, %v137
        %vm145 = vcmp.lt.f32.partialorder %v144, 0.0004427343
        %v146 = vsel %vm145, %v143, %v140
        %v147 = vadd.f32 %v133, %v146
        %v148 = vmul.f32 %v147, -6.2831855
        %v149 = vmax.f32 %v148, -87.33655
        %v150 = vmin.f32 %v149, -1.0000001e-07
        %v151 = vmul.f32 %v150, 1.442695
        %v152 = vpow.pop %v151
        %v153 = vmul.f32 %v152, %v152
        %v154 = vmul.f32 %v153, %v152
        %v155 = vmul.f32 %v154, %v152
        %v156 = vmul.f32 %v155, %v152
        %v157 = vmul.f32 %v150, 0.041666668
        %v158 = vsub.f32 1.0, %v152
        %v159 = vsub.f32 1.0, %v153
        %v160 = vmul.f32 %v158, %v159
        %v161 = vsub.f32 1.0, %v154
        %v162 = vmul.f32 %v160, %v161
        %v163 = vsub.f32 1.0, %v155
        %v164 = vmul.f32 %v162, %v163
        %v165 = vsub.f32 1.0, %v156
        %v166 = vmul.f32 %v164, %v165
        %v167 = vlog2.pop %v166
        %v168 = vmul.f32 %v167, 0.6931472
        %v169 = vadd.f32 %v157, %v168
        %v170 = vmul.f32 %v156, %v152
        %v171 = vsub.f32 1.0, %v170
        %v172 = vmul.f32 %v156, %v153
        %v173 = vsub.f32 1.0, %v172
        %v174 = vmul.f32 %v171, %v173
        %v175 = vmul.f32 %v156, %v154
        %v176 = vsub.f32 1.0, %v175
        %v177 = vmul.f32 %v174, %v176
        %v178 = vmul.f32 %v156, %v155
        %v179 = vsub.f32 1.0, %v178
        %v180 = vmul.f32 %v177, %v179
        %v181 = vmul.f32 %v156, %v156
        %v182 = vsub.f32 1.0, %v181
        %v183 = vmul.f32 %v180, %v182
        %v184 = vlog2.pop %v183
        %v185 = vmul.f32 %v184, 0.6931472
        %v186 = vadd.f32 %v169, %v185
        %v187 = vmul.f32 %v181, %v152
        %v188 = vsub.f32 1.0, %v187
        %v189 = vmul.f32 %v181, %v153
        %v190 = vsub.f32 1.0, %v189
        %v191 = vmul.f32 %v188, %v190
        %v192 = vmul.f32 %v181, %v154
        %v193 = vsub.f32 1.0, %v192
        %v194 = vmul.f32 %v191, %v193
        %v195 = vmul.f32 %v181, %v155
        %v196 = vsub.f32 1.0, %v195
        %v197 = vmul.f32 %v194, %v196
        %v198 = vmul.f32 %v181, %v156
        %v199 = vsub.f32 1.0, %v198
        %v200 = vmul.f32 %v197, %v199
        %v201 = vlog2.pop %v200
        %v202 = vmul.f32 %v201, 0.6931472
        %v203 = vadd.f32 %v186, %v202
        %v204 = vmul.f32 %v198, %v152
        %v205 = vsub.f32 1.0, %v204
        %v206 = vmul.f32 %v198, %v153
        %v207 = vsub.f32 1.0, %v206
        %v208 = vmul.f32 %v205, %v207
        %v209 = vmul.f32 %v198, %v154
        %v210 = vsub.f32 1.0, %v209
        %v211 = vmul.f32 %v208, %v210
        %v212 = vmul.f32 %v198, %v155
        %v213 = vsub.f32 1.0, %v212
        %v214 = vmul.f32 %v211, %v213
        %v215 = vmul.f32 %v198, %v156
        %v216 = vsub.f32 1.0, %v215
        %v217 = vmul.f32 %v214, %v216
        %v218 = vlog2.pop %v217
        %v219 = vmul.f32 %v218, 0.6931472
        %v220 = vadd.f32 %v203, %v219
        %v221 = vsub.f32 0.0, %v220
        %222 = vst [vmem:[%s131] sm:$0xff] %v221
        %s223 = sand.u32 %s52, 1
        %s224 = scalar_lea.sflag [#allocation4], %s223
        %s225 = sand.u32 %s52, 1
        %s226 = smul.addr %s225, 8
        %s227 = scalar_lea.vmem [#allocation5], %s226
        // Predicated region
        $region29: #{tpu_custom_call.1} parent=23 // pred_check
          %p228 = pneg %p62
        $region30: #{tpu_custom_call.1} parent=23 // pred_check_branch
          %230 = sbr.rel (%p228) target = $region32
        $region31: #{tpu_custom_call.1} parent=23 // pred_region
          %s232 = ssub.s32 128, 128
          %233 = vsyncadd %s224, %s232
          %s234 = smul.addr %s18, 128
          %s235 = scalar_lea.hbm %s1, %s234
          %s237 = sshll.u32 %s227, 4
          %s238 = int_to_ptr.vmem [resolvable:$true] %s237
          %240 = dma.vmem_to_hbm [thread:$0]  %s238, 128, %s235, %s224
        $region32: #{tpu_custom_call.1} parent=23 // pred_fallthru
          _
      $region24: #{tpu_custom_call.1} parent=5 // pred_fallthru
        _
      %p241 = scmp.le.s32.totalorder 2, %s13
      // Predicated region
      $region33: #{tpu_custom_call.1} parent=5 // pred_check
        %p242 = pneg %p241
      $region34: #{tpu_custom_call.1} parent=5 // pred_check_branch
        %244 = sbr.rel (%p242) target = $region36
      $region35: #{tpu_custom_call.1} parent=5 // pred_region
        %s245 = ssub.s32 %s13, 2
        // Predicated region
        $region37: #{tpu_custom_call.1} parent=35 // pred_check
          %p246 = pneg %p68
        $region38: #{tpu_custom_call.1} parent=35 // pred_check_branch
          %248 = sbr.rel (%p246) target = $region40
        $region39: #{tpu_custom_call.1} parent=35 // pred_region
          %s249 = sand.u32 %s53, 1
          %s250 = scalar_lea.sflag [#allocation4], %s249
          %s251 = sand.u32 %s53, 1
          %s252 = smul.addr %s251, 8
          %s253 = scalar_lea.vmem [#allocation5], %s252
          %254 = dma.done %s250, 128
        $region40: #{tpu_custom_call.1} parent=35 // pred_fallthru
          _
      $region36: #{tpu_custom_call.1} parent=5 // pred_fallthru
        _
    $region6: #{tpu_custom_call.1} parent=1 // loop_footer
      %s17 = sadd.s32 1, %s13
    $region7: #{tpu_custom_call.1} parent=1 // loop_footer_branch
      %12 = sbr.rel target = $region3
    $region8: #{tpu_custom_call.1} parent=1 // loop_exit
      _
    %255 = vsyncpa [#allocation3], 1
    %s256 = scalar_lea.sflag [#allocation3], 1
    %257 = vsyncpa %s256, 1
    %258 = vsyncpa [#allocation4], 1
    %s259 = scalar_lea.sflag [#allocation4], 1
    %260 = vsyncpa %s259, 1

</llo_original>
